<compile_context>
chip_gen: v5e
topology: v5e:2x2
jax: 0.10.0
libtpu: 0.0.40
codegen_flags: <defaults>
</compile_context>

<pallas_src>
import functools

import jax
import jax.numpy as jnp
from jax.experimental import pallas as pl
from jax.experimental.pallas import tpu as pltpu


def _round_up(x: int, m: int) -> int:
    return (x + m - 1) // m * m


def _overall_kernel(x_ref, theta_ref, w_ref, b_ref, xhat_ref, z_ref, wz_ref, *,
                    d: int, mxu_dtype):
    """Gridded over the sample axis N.

    Grid step 0: build z = sigmoid(theta) masked to the off-diagonal d x d block
    (padding lanes zeroed), write it to the resident z output, and stage the
    edge-masked weights wz = z * W into VMEM scratch (cast once to the MXU dtype).

    Every grid step: X_tile @ wz + b on the MXU, f32 accumulation, lane-dense store.
    """
    @pl.when(pl.program_id(0) == 0)
    def _init():
        theta = theta_ref[...]                                    # (Dp, Dp) f32
        dp = theta.shape[0]
        row = jax.lax.broadcasted_iota(jnp.int32, (dp, dp), 0)
        col = jax.lax.broadcasted_iota(jnp.int32, (dp, dp), 1)
        # No self-loops, and zero everything in the zero-padded region (sigmoid(0)=0.5
        # there otherwise).  Single select instead of compare+astype+multiply.
        valid = (row != col) & (row < d) & (col < d)
        z = jnp.where(valid, jax.nn.sigmoid(theta), 0.0)
        z_ref[...] = z
        wz_ref[...] = (z * w_ref[...]).astype(mxu_dtype)          # cast once per call

    # f_net: single linear layer with edge-masked weights (SEM reconstruction).
    x_tile = x_ref[...].astype(mxu_dtype)                         # (TN, Dp)
    acc = jnp.dot(x_tile, wz_ref[...], preferred_element_type=jnp.float32)
    xhat_ref[...] = acc + b_ref[...]                              # bias broadcast (1, Dp)


def overall_net_forward(x, theta, w, b, *, n_block: int = 256,
                        mxu_dtype=jnp.float32):
    """Mirrors OverallNet.forward(X) -> (X_hat, z_adjacency, z, theta).

    x: (N, d) samples, theta/w: (d, d), b: (d,).
    n_block: target N-tile size (rounded to a sublane multiple of 8).
    mxu_dtype: jnp.float32, or jnp.bfloat16 to feed the MXU at full bf16 rate on v6e/v7x.
    """
    n, d = x.shape
    assert theta.shape == (d, d) and w.shape == (d, d) and b.shape == (d,)

    d_pad = _round_up(max(d, 128), 128)                 # lane-dense D axis
    tn = min(_round_up(n, 8), _round_up(n_block, 8))    # sublane-aligned N tile
    n_pad = _round_up(n, tn)
    grid = (n_pad // tn,)

    f32 = jnp.float32
    x_p = jnp.pad(x.astype(f32), ((0, n_pad - n), (0, d_pad - d)))
    theta_p = jnp.pad(theta.astype(f32), ((0, d_pad - d), (0, d_pad - d)))
    w_p = jnp.pad(w.astype(f32), ((0, d_pad - d), (0, d_pad - d)))
    b_p = jnp.pad(b.astype(f32), (0, d_pad - d)).reshape(1, d_pad)

    kernel = functools.partial(_overall_kernel, d=d, mxu_dtype=mxu_dtype)

    x_hat_p, z_p = pl.pallas_call(
        kernel,
        out_shape=(
            jax.ShapeDtypeStruct((n_pad, d_pad), f32),            # X_hat (padded)
            jax.ShapeDtypeStruct((d_pad, d_pad), f32),            # z (padded)
        ),
        grid_spec=pltpu.PrefetchScalarGridSpec(
            num_scalar_prefetch=0,
            grid=grid,
            in_specs=[
                pl.BlockSpec((tn, d_pad), lambda i: (i, 0)),      # X: streamed over N
                pl.BlockSpec((d_pad, d_pad), lambda i: (0, 0)),   # theta: resident
                pl.BlockSpec((d_pad, d_pad), lambda i: (0, 0)),   # W: resident
                pl.BlockSpec((1, d_pad), lambda i: (0, 0)),       # bias: resident
            ],
            out_specs=(
                pl.BlockSpec((tn, d_pad), lambda i: (i, 0)),      # X_hat tile per step
                pl.BlockSpec((d_pad, d_pad), lambda i: (0, 0)),   # z: written at step 0
            ),
            scratch_shapes=[pltpu.VMEM((d_pad, d_pad), mxu_dtype)],  # wz = z*W, resident
        ),
        # z / wz are carried across the N axis -> "arbitrary".  (For megacore v7x
        # parallelism over N, recompute wz per tile and mark this axis "parallel".)
        compiler_params=pltpu.CompilerParams(dimension_semantics=("arbitrary",)),
    )(x_p, theta_p, w_p, b_p)

    x_hat = x_hat_p[:n, :d]
    z = z_p[:d, :d]
    z_adjacency = z           # fNet returns (X_hat, z_adjacency); OverallNet appends (z, theta)
    return x_hat, z_adjacency, z, theta


if __name__ == "__main__":
    # Small shapes consistent with the module: d DAG variables, batch of n samples.
    d = 16     # number of DAG nodes / variables
    n = 32     # batch_size

    key = jax.random.PRNGKey(0)
    k_x, k_theta, k_w, k_b = jax.random.split(key, 4)

    # Deterministic synthetic inputs / parameters (no checkpoint loading).
    x = jax.random.normal(k_x, (n, d), dtype=jnp.float32)
    theta = 0.1 * jax.random.normal(k_theta, (d, d), dtype=jnp.float32)  # hNet learnable Theta
    w = 0.1 * jax.random.normal(k_w, (d, d), dtype=jnp.float32)          # fNet linear weight
    b = 0.01 * jax.random.normal(k_b, (d,), dtype=jnp.float32)           # fNet bias (f_bias=True)

    # Pure-JAX reference.
    off_diag = 1.0 - jnp.eye(d, dtype=jnp.float32)
    z_ref = jax.nn.sigmoid(theta) * off_diag
    xhat_ref = x @ (z_ref * w) + b

    # f32 path — small N-tile (n_block=8) so the demo exercises a 4-step grid with the
    # resident z / wz scratch carried across steps.
    fwd_f32 = jax.jit(functools.partial(overall_net_forward, n_block=8,
                                        mxu_dtype=jnp.float32))
    x_hat, z_adj, z_out, theta_out = jax.block_until_ready(fwd_f32(x, theta, w, b))
    assert x_hat.shape == (n, d) and z_adj.shape == (d, d) and theta_out.shape == (d, d)
    assert jnp.allclose(z_out, z_ref, atol=1e-5), "z mismatch (f32 path)"
    assert jnp.allclose(x_hat, xhat_ref, atol=1e-4), "X_hat mismatch (f32 path)"

    # bf16-at-the-MXU-boundary path (the v6e/v7x recommendation); f32 accumulation,
    # sigmoid/mask stays f32.  Looser tolerance for the bf16 operand rounding.
    fwd_bf16 = jax.jit(functools.partial(overall_net_forward, n_block=8,
                                         mxu_dtype=jnp.bfloat16))
    x_hat_bf, z_adj_bf, z_bf, _ = jax.block_until_ready(fwd_bf16(x, theta, w, b))
    assert jnp.allclose(z_bf, z_ref, atol=1e-5), "z mismatch (bf16 path)"
    assert jnp.allclose(x_hat_bf, xhat_ref, atol=3e-2), "X_hat mismatch (bf16 path)"

    print("KERNEL_OK")
</pallas_src>

<mosaic_0001>
module attributes {stable_mosaic.version = 11 : i64} {
  func.func @_overall_kernel(%arg0: i32, %arg1: memref<8x128xf32, #tpu.memory_space<vmem>>, %arg2: memref<128x128xf32, #tpu.memory_space<vmem>>, %arg3: memref<128x128xf32, #tpu.memory_space<vmem>>, %arg4: memref<1x128xf32, #tpu.memory_space<vmem>>, %arg5: memref<8x128xf32, #tpu.memory_space<vmem>>, %arg6: memref<128x128xf32, #tpu.memory_space<vmem>>, %arg7: memref<128x128xf32, #tpu.memory_space<vmem>>) attributes {dimension_semantics = [#tpu.dimension_semantics<arbitrary>], iteration_bounds = array<i64: 4>, scalar_prefetch = 0 : i64, scratch_operands = 1 : i64, tpu.core_type = #tpu.core_type<tc>, window_params = [{transform_indices = @transform_0, window_bounds = array<i64: 8, 128>}, {pipeline_mode = #tpu.pipeline_mode<synchronous>, transform_indices = @transform_1, window_bounds = array<i64: 128, 128>}, {pipeline_mode = #tpu.pipeline_mode<synchronous>, transform_indices = @transform_2, window_bounds = array<i64: 128, 128>}, {pipeline_mode = #tpu.pipeline_mode<synchronous>, transform_indices = @transform_3, window_bounds = array<i64: 1, 128>}, {transform_indices = @transform_4, window_bounds = array<i64: 8, 128>}, {pipeline_mode = #tpu.pipeline_mode<synchronous>, transform_indices = @transform_5, window_bounds = array<i64: 128, 128>}]} {
    %c0_i32 = arith.constant 0 : i32
    %0 = arith.cmpi eq, %arg0, %c0_i32 : i32
    %1 = arith.extui %0 : i1 to i32
    %c0_i32_0 = arith.constant 0 : i32
    %2 = arith.cmpi ne, %1, %c0_i32_0 : i32
    scf.if %2 {
      %c0_8 = arith.constant 0 : index
      %c0_9 = arith.constant 0 : index
      %10 = vector.load %arg2[%c0_8, %c0_9] : memref<128x128xf32, #tpu.memory_space<vmem>>, vector<128x128xf32>
      %11 = tpu.iota {dimensions = array<i32: 0>} : vector<128x128xi32>
      %12 = tpu.iota {dimensions = array<i32: 1>} : vector<128x128xi32>
      %13 = arith.cmpi ne, %11, %12 : vector<128x128xi32>
      %c16_i32 = arith.constant 16 : i32
      %14 = vector.broadcast %c16_i32 : i32 to vector<128x128xi32>
      %15 = arith.cmpi slt, %11, %14 : vector<128x128xi32>
      %16 = arith.andi %13, %15 : vector<128x128xi1>
      %c16_i32_10 = arith.constant 16 : i32
      %17 = vector.broadcast %c16_i32_10 : i32 to vector<128x128xi32>
      %18 = arith.cmpi slt, %12, %17 : vector<128x128xi32>
      %19 = arith.andi %16, %18 : vector<128x128xi1>
      %20 = arith.negf %10 : vector<128x128xf32>
      %21 = math.exp %20 : vector<128x128xf32>
      %cst_11 = arith.constant 1.000000e+00 : f32
      %22 = vector.broadcast %cst_11 : f32 to vector<128x128xf32>
      %23 = arith.addf %22, %21 : vector<128x128xf32>
      %24 = arith.divf %22, %23 : vector<128x128xf32>
      %cst_12 = arith.constant 0.000000e+00 : f32
      %25 = vector.broadcast %cst_12 : f32 to vector<128x128xf32>
      %26 = arith.select %19, %24, %25 : vector<128x128xi1>, vector<128x128xf32>
      %c0_13 = arith.constant 0 : index
      %c0_14 = arith.constant 0 : index
      %27 = vector.load %arg6[%c0_13, %c0_14] : memref<128x128xf32, #tpu.memory_space<vmem>>, vector<128x128xf32>
      tpu.vector_store %arg6[%c0_13, %c0_14], %26 {strides = array<i32>} : memref<128x128xf32, #tpu.memory_space<vmem>>, vector<128x128xf32>,
      %c0_15 = arith.constant 0 : index
      %c0_16 = arith.constant 0 : index
      %28 = vector.load %arg3[%c0_15, %c0_16] : memref<128x128xf32, #tpu.memory_space<vmem>>, vector<128x128xf32>
      %29 = arith.mulf %26, %28 : vector<128x128xf32>
      %c0_17 = arith.constant 0 : index
      %c0_18 = arith.constant 0 : index
      %30 = vector.load %arg7[%c0_17, %c0_18] : memref<128x128xf32, #tpu.memory_space<vmem>>, vector<128x128xf32>
      tpu.vector_store %arg7[%c0_17, %c0_18], %29 {strides = array<i32>} : memref<128x128xf32, #tpu.memory_space<vmem>>, vector<128x128xf32>,
    } else {
    }
    %c0 = arith.constant 0 : index
    %c0_1 = arith.constant 0 : index
    %3 = vector.load %arg1[%c0, %c0_1] : memref<8x128xf32, #tpu.memory_space<vmem>>, vector<8x128xf32>
    %c0_2 = arith.constant 0 : index
    %c0_3 = arith.constant 0 : index
    %4 = vector.load %arg7[%c0_2, %c0_3] : memref<128x128xf32, #tpu.memory_space<vmem>>, vector<128x128xf32>
    %cst = arith.constant dense<0.000000e+00> : vector<8x128xf32>
    %5 = tpu.matmul %3, %4, %cst {dimension_numbers = #tpu.dot_dimension_numbers<[1], [0], [0], [1], [0, 0, 1, 1], [], []>} : vector<8x128xf32>, vector<128x128xf32>, vector<8x128xf32> -> vector<8x128xf32>
    %c0_4 = arith.constant 0 : index
    %c0_5 = arith.constant 0 : index
    %6 = vector.load %arg4[%c0_4, %c0_5] : memref<1x128xf32, #tpu.memory_space<vmem>>, vector<1x128xf32>
    %7 = vector.broadcast %6 : vector<1x128xf32> to vector<8x128xf32>
    %8 = arith.addf %5, %7 : vector<8x128xf32>
    %c0_6 = arith.constant 0 : index
    %c0_7 = arith.constant 0 : index
    %9 = vector.load %arg5[%c0_6, %c0_7] : memref<8x128xf32, #tpu.memory_space<vmem>>, vector<8x128xf32>
    tpu.vector_store %arg5[%c0_6, %c0_7], %8 {strides = array<i32>} : memref<8x128xf32, #tpu.memory_space<vmem>>, vector<8x128xf32>,
    return
  }
  func.func @transform_0(%arg0: i32) -> (i32, i32) {
    %c0_i32 = arith.constant 0 : i32
    %c0_i32_0 = arith.constant 0 : i32
    return %arg0, %c0_i32 : i32, i32
  }
  func.func @transform_1(%arg0: i32) -> (i32, i32) {
    %c0_i32 = arith.constant 0 : i32
    %c0_i32_0 = arith.constant 0 : i32
    %c0_i32_1 = arith.constant 0 : i32
    return %c0_i32, %c0_i32_0 : i32, i32
  }
  func.func @transform_2(%arg0: i32) -> (i32, i32) {
    %c0_i32 = arith.constant 0 : i32
    %c0_i32_0 = arith.constant 0 : i32
    %c0_i32_1 = arith.constant 0 : i32
    return %c0_i32, %c0_i32_0 : i32, i32
  }
  func.func @transform_3(%arg0: i32) -> (i32, i32) {
    %c0_i32 = arith.constant 0 : i32
    %c0_i32_0 = arith.constant 0 : i32
    %c0_i32_1 = arith.constant 0 : i32
    return %c0_i32, %c0_i32_0 : i32, i32
  }
  func.func @transform_4(%arg0: i32) -> (i32, i32) {
    %c0_i32 = arith.constant 0 : i32
    %c0_i32_0 = arith.constant 0 : i32
    return %arg0, %c0_i32 : i32, i32
  }
  func.func @transform_5(%arg0: i32) -> (i32, i32) {
    %c0_i32 = arith.constant 0 : i32
    %c0_i32_0 = arith.constant 0 : i32
    %c0_i32_1 = arith.constant 0 : i32
    return %c0_i32, %c0_i32_0 : i32, i32
  }
}

</mosaic_0001>

<llo_original>
// kernel: overall_net_forward.1
$region0: #{overall_net_forward.1}
  #allocation0 [shape = 'u32[]', space=smem, size = 0x4, offset = 0x4, fixed_abs, tag = 'smem constant byte address 0x4 - core index']
  #allocation1 [shape = 'u32[72,128]{1,0:T(1,128)}', space=vmem, size = 0x9000, scoped, tag = 'internal scratch']
  #allocation2 [shape = 'f32[128,128]{1,0:T(8,128)}', space=vmem, size = 0x10000, scoped, tag = 'scratch operand']
  %s0 = inlined_call_operand.vmem [shape: f32[32,128], index: 0, kind: input, shape index: {}]
  %s1 = inlined_call_operand.vmem [shape: f32[128,128], index: 1, kind: input, shape index: {}]
  %s2 = inlined_call_operand.vmem [shape: f32[128,128], index: 2, kind: input, shape index: {}]
  %s3 = inlined_call_operand.vmem [shape: f32[1,128], index: 3, kind: input, shape index: {}]
  %s4 = inlined_call_operand.vmem [shape: f32[32,128], index: 4, kind: output, shape index: {0}]
  %s5 = inlined_call_operand.vmem [shape: f32[128,128], index: 5, kind: output, shape index: {1}]
  %6 = xla_tuple %s4, %s5
  %s7 = sld [smem:[#allocation0]]
  $region61: #{overall_net_forward.1} parent=0
    _
  %s9 = ssub.s32 1, %s7
  %s10 = scalar_select 0, %s9, %s7
  loop: start=0, step=1, limit=6
  $region2: #{overall_net_forward.1} parent=0 // loop_pre_header
    _
  $region3: #{overall_net_forward.1} parent=0 // loop_header
    %s12 = sphi 0, %s16
    %p13 = scmp.ge.s32.totalorder %s12, 6
    %s22 = sphi 0, %s24
    %s25 = sphi 0, %s22
    %s26 = sphi 0, %s25
    %s42 = sphi 0, %s26
    %s46 = sphi 0, %s46
    %s48 = sphi 0, %s46
    %s49 = sphi 0, %s48
    %s63 = sphi 0, %s49
    %s67 = sphi 0, %s67
    %s69 = sphi 0, %s67
    %s70 = sphi 0, %s69
    %s84 = sphi 0, %s70
    %s88 = sphi 0, %s88
    %s90 = sphi 0, %s88
    %s91 = sphi 0, %s90
    %s105 = sphi 0, %s91
    %s111 = sphi 0, %s113
    %s114 = sphi 0, %s111
    %s115 = sphi 0, %s114
    %s131 = sphi 0, %s115
    %s135 = sphi 0, %s135
    %s137 = sphi 0, %s135
    %s138 = sphi 0, %s137
    %s152 = sphi 0, %s138
  $region4: #{overall_net_forward.1} parent=0 // loop_header_branch
    %15 = sbr.rel (%p13) target = $region8
  $region5: #{overall_net_forward.1} parent=0 // loop_body
    %s17 = ssub.s32 %s12, 1
    %s18 = ssub.s32 %s12, 2
    %s19 = sadd.s32 %s12, 1
    %s20 = ssub.s32 %s12, %s19
    %p21 = scmp.eq.s32.totalorder %s20, 0
    %s23 = sadd.s32 %s22, 1
    %s24 = scalar_select %p21, %s22, %s23
    %p27 = pneg %p21
    %p28 = scmp.eq.s32.totalorder %s12, 3
    %p29 = por %p27, %p28
    %p30 = scmp.ne.s32.totalorder %s22, %s25
    %p31 = scmp.eq.s32.totalorder %s12, 0
    %p32 = por %p30, %p31
    %p33 = scmp.ne.s32.totalorder %s22, %s25
    %p34 = scmp.eq.s32.totalorder %s17, 3
    %p35 = por %p33, %p34
    %p36 = scmp.ne.s32.totalorder %s25, %s26
    %p37 = scmp.eq.s32.totalorder %s17, 0
    %p38 = por %p36, %p37
    %p39 = scmp.ne.s32.totalorder %s25, %s26
    %p40 = scmp.eq.s32.totalorder %s18, 3
    %p41 = por %p39, %p40
    %p43 = scmp.ne.s32.totalorder %s26, %s42
    %p44 = scmp.eq.s32.totalorder %s18, 0
    %p45 = por %p43, %p44
    %s47 = sadd.s32 %s46, 1
    %p50 = scmp.eq.s32.totalorder %s12, 3
    %p51 = scmp.ne.s32.totalorder %s46, %s48
    %p52 = scmp.eq.s32.totalorder %s12, 0
    %p53 = por %p51, %p52
    %p54 = scmp.ne.s32.totalorder %s46, %s48
    %p55 = scmp.eq.s32.totalorder %s17, 3
    %p56 = por %p54, %p55
    %p57 = scmp.ne.s32.totalorder %s48, %s49
    %p58 = scmp.eq.s32.totalorder %s17, 0
    %p59 = por %p57, %p58
    %p60 = scmp.ne.s32.totalorder %s48, %s49
    %p61 = scmp.eq.s32.totalorder %s18, 3
    %p62 = por %p60, %p61
    %p64 = scmp.ne.s32.totalorder %s49, %s63
    %p65 = scmp.eq.s32.totalorder %s18, 0
    %p66 = por %p64, %p65
    %s68 = sadd.s32 %s67, 1
    %p71 = scmp.eq.s32.totalorder %s12, 3
    %p72 = scmp.ne.s32.totalorder %s67, %s69
    %p73 = scmp.eq.s32.totalorder %s12, 0
    %p74 = por %p72, %p73
    %p75 = scmp.ne.s32.totalorder %s67, %s69
    %p76 = scmp.eq.s32.totalorder %s17, 3
    %p77 = por %p75, %p76
    %p78 = scmp.ne.s32.totalorder %s69, %s70
    %p79 = scmp.eq.s32.totalorder %s17, 0
    %p80 = por %p78, %p79
    %p81 = scmp.ne.s32.totalorder %s69, %s70
    %p82 = scmp.eq.s32.totalorder %s18, 3
    %p83 = por %p81, %p82
    %p85 = scmp.ne.s32.totalorder %s70, %s84
    %p86 = scmp.eq.s32.totalorder %s18, 0
    %p87 = por %p85, %p86
    %s89 = sadd.s32 %s88, 1
    %p92 = scmp.eq.s32.totalorder %s12, 3
    %p93 = scmp.ne.s32.totalorder %s88, %s90
    %p94 = scmp.eq.s32.totalorder %s12, 0
    %p95 = por %p93, %p94
    %p96 = scmp.ne.s32.totalorder %s88, %s90
    %p97 = scmp.eq.s32.totalorder %s17, 3
    %p98 = por %p96, %p97
    %p99 = scmp.ne.s32.totalorder %s90, %s91
    %p100 = scmp.eq.s32.totalorder %s17, 0
    %p101 = por %p99, %p100
    %p102 = scmp.ne.s32.totalorder %s90, %s91
    %p103 = scmp.eq.s32.totalorder %s18, 3
    %p104 = por %p102, %p103
    %p106 = scmp.ne.s32.totalorder %s91, %s105
    %p107 = scmp.eq.s32.totalorder %s18, 0
    %p108 = por %p106, %p107
    %s109 = ssub.s32 %s12, %s19
    %p110 = scmp.eq.s32.totalorder %s109, 0
    %s112 = sadd.s32 %s111, 1
    %s113 = scalar_select %p110, %s111, %s112
    %p116 = pneg %p110
    %p117 = scmp.eq.s32.totalorder %s12, 3
    %p118 = por %p116, %p117
    %p119 = scmp.ne.s32.totalorder %s111, %s114
    %p120 = scmp.eq.s32.totalorder %s12, 0
    %p121 = por %p119, %p120
    %p122 = scmp.ne.s32.totalorder %s111, %s114
    %p123 = scmp.eq.s32.totalorder %s17, 3
    %p124 = por %p122, %p123
    %p125 = scmp.ne.s32.totalorder %s114, %s115
    %p126 = scmp.eq.s32.totalorder %s17, 0
    %p127 = por %p125, %p126
    %p128 = scmp.ne.s32.totalorder %s114, %s115
    %p129 = scmp.eq.s32.totalorder %s18, 3
    %p130 = por %p128, %p129
    %p132 = scmp.ne.s32.totalorder %s115, %s131
    %p133 = scmp.eq.s32.totalorder %s18, 0
    %p134 = por %p132, %p133
    %s136 = sadd.s32 %s135, 1
    %p139 = scmp.eq.s32.totalorder %s12, 3
    %p140 = scmp.ne.s32.totalorder %s135, %s137
    %p141 = scmp.eq.s32.totalorder %s12, 0
    %p142 = por %p140, %p141
    %p143 = scmp.ne.s32.totalorder %s135, %s137
    %p144 = scmp.eq.s32.totalorder %s17, 3
    %p145 = por %p143, %p144
    %p146 = scmp.ne.s32.totalorder %s137, %s138
    %p147 = scmp.eq.s32.totalorder %s17, 0
    %p148 = por %p146, %p147
    %p149 = scmp.ne.s32.totalorder %s137, %s138
    %p150 = scmp.eq.s32.totalorder %s18, 3
    %p151 = por %p149, %p150
    %p153 = scmp.ne.s32.totalorder %s138, %s152
    %p154 = scmp.eq.s32.totalorder %s18, 0
    %p155 = por %p153, %p154
    %p156 = scmp.le.s32.totalorder 1, %s12
    %p157 = scmp.lt.s32.totalorder %s12, 5
    %p158 = pnand %p156, %p157
    %p159 = pneg %p158
    // Predicated region
    $region9: #{overall_net_forward.1} parent=5 // pred_check
      _
    $region10: #{overall_net_forward.1} parent=5 // pred_check_branch
      %161 = sbr.rel (%p158) target = $region12
    $region11: #{overall_net_forward.1} parent=5 // pred_region
      %s162 = ssub.s32 %s12, 1
      // Predicated region
      $region13: #{overall_net_forward.1} parent=11 // pred_check
        %p163 = pneg %p59
      $region14: #{overall_net_forward.1} parent=11 // pred_check_branch
        %165 = sbr.rel (%p163) target = $region16
      $region15: #{overall_net_forward.1} parent=11 // pred_region
        _
      $region16: #{overall_net_forward.1} parent=11 // pred_fallthru
        _
      // Predicated region
      $region17: #{overall_net_forward.1} parent=11 // pred_check
        %p166 = pneg %p80
      $region18: #{overall_net_forward.1} parent=11 // pred_check_branch
        %168 = sbr.rel (%p166) target = $region20
      $region19: #{overall_net_forward.1} parent=11 // pred_region
        _
      $region20: #{overall_net_forward.1} parent=11 // pred_fallthru
        _
      // Predicated region
      $region21: #{overall_net_forward.1} parent=11 // pred_check
        %p169 = pneg %p101
      $region22: #{overall_net_forward.1} parent=11 // pred_check_branch
        %171 = sbr.rel (%p169) target = $region24
      $region23: #{overall_net_forward.1} parent=11 // pred_region
        _
      $region24: #{overall_net_forward.1} parent=11 // pred_fallthru
        _
    $region12: #{overall_net_forward.1} parent=5 // pred_fallthru
      _
    %p172 = scmp.lt.s32.totalorder %s12, 4
    // Predicated region
    $region25: #{overall_net_forward.1} parent=5 // pred_check
      %p173 = pneg %p172
    $region26: #{overall_net_forward.1} parent=5 // pred_check_branch
      %175 = sbr.rel (%p173) target = $region28
    $region27: #{overall_net_forward.1} parent=5 // pred_region
      // Predicated region
      $region29: #{overall_net_forward.1} parent=27 // pred_check
        %p176 = pneg %p32
      $region30: #{overall_net_forward.1} parent=27 // pred_check_branch
        %178 = sbr.rel (%p176) target = $region32
      $region31: #{overall_net_forward.1} parent=27 // pred_region
        %p179 = scmp.lt.s32.totalorder %s12, 3
        %s180 = scalar_select %p179, %s12, 3
        %s181 = smul.addr %s180, 8
        %s182 = scalar_lea.vmem %s0, %s181
      $region32: #{overall_net_forward.1} parent=27 // pred_fallthru
        _
    $region28: #{overall_net_forward.1} parent=5 // pred_fallthru
      _
    %p183 = scmp.le.s32.totalorder 1, %s12
    %p184 = scmp.lt.s32.totalorder %s12, 5
    %p185 = pnand %p183, %p184
    %p186 = pneg %p185
    // Predicated region
    $region33: #{overall_net_forward.1} parent=5 // pred_check
      _
    $region34: #{overall_net_forward.1} parent=5 // pred_check_branch
      %188 = sbr.rel (%p185) target = $region36
    $region35: #{overall_net_forward.1} parent=5 // pred_region
      %s189 = ssub.s32 %s12, 1
      %p190 = scmp.lt.s32.totalorder %s17, 3
      %s191 = scalar_select %p190, %s17, 3
      %s192 = smul.addr %s191, 8
      %s193 = scalar_lea.vmem %s0, %s192
      %p194 = pneg %p38
      %p195 = pneg %p35
      %p196 = pneg %p59
      %p197 = pneg %p56
      %p198 = pneg %p80
      %p199 = pneg %p77
      %p200 = pneg %p101
      %p201 = pneg %p98
      %p202 = pneg %p127
      %p203 = pneg %p124
      %p204 = scmp.lt.s32.totalorder %s17, 3
      %s205 = scalar_select %p204, %s17, 3
      %s206 = smul.addr %s205, 8
      %s207 = scalar_lea.vmem %s4, %s206
      %p208 = pneg %p148
      %p209 = pneg %p145
      %p210 = scmp.lt.s32.totalorder %s17, 3
      %s211 = scalar_select %p210, %s17, 3
      %s212 = smul.addr %s211, 8
      %s213 = scalar_lea.vmem %s0, %s212
      %p214 = scmp.lt.s32.totalorder %s17, 3
      %s215 = scalar_select %p214, %s17, 3
      %s216 = smul.addr %s215, 8
      %s217 = scalar_lea.vmem %s4, %s216
      %p218 = scmp.eq.s32.totalorder %s17, 0
      // Predicated region
      $region37: #{overall_net_forward.1} parent=35 // pred_check
        %p219 = pneg %p218
      $region38: #{overall_net_forward.1} parent=35 // pred_check_branch
        %221 = sbr.rel (%p219) target = $region40
      $region39: #{overall_net_forward.1} parent=35 // pred_region
        %v222 = vld [vmem:[%s1] sm:$0xff]
        %v223 = vld [vmem:[%s1 + $0x8] sm:$0xff]
        %v224 = vld [vmem:[%s1 + $0x10] sm:$0xff]
        %v225 = vld [vmem:[%s1 + $0x18] sm:$0xff]
        %v226 = vld [vmem:[%s1 + $0x20] sm:$0xff]
        %v227 = vld [vmem:[%s1 + $0x28] sm:$0xff]
        %v228 = vld [vmem:[%s1 + $0x30] sm:$0xff]
        %v229 = vld [vmem:[%s1 + $0x38] sm:$0xff]
        %v230 = vld [vmem:[%s1 + $0x40] sm:$0xff]
        %v231 = vld [vmem:[%s1 + $0x48] sm:$0xff]
        %v232 = vld [vmem:[%s1 + $0x50] sm:$0xff]
        %v233 = vld [vmem:[%s1 + $0x58] sm:$0xff]
        %v234 = vld [vmem:[%s1 + $0x60] sm:$0xff]
        %v235 = vld [vmem:[%s1 + $0x68] sm:$0xff]
        %v236 = vld [vmem:[%s1 + $0x70] sm:$0xff]
        %v237 = vld [vmem:[%s1 + $0x78] sm:$0xff]
        %v238 = vlaneseq
        %v239 = vshrl.u32 %v238, 7
        %v240 = vadd.s32 %v239, 8
        %v241 = vadd.s32 %v239, 16
        %v242 = vadd.s32 %v239, 24
        %v243 = vadd.s32 %v239, 32
        %v244 = vadd.s32 %v239, 40
        %v245 = vadd.s32 %v239, 48
        %v246 = vadd.s32 %v239, 56
        %v247 = vadd.s32 %v239, 64
        %v248 = vadd.s32 %v239, 72
        %v249 = vadd.s32 %v239, 80
        %v250 = vadd.s32 %v239, 88
        %v251 = vadd.s32 %v239, 96
        %v252 = vadd.s32 %v239, 104
        %v253 = vadd.s32 %v239, 112
        %v254 = vadd.s32 %v239, 120
        %v255 = vlaneseq
        %v256 = vand.u32 %v255, 127
        %vm257 = vcmp.ne.s32.totalorder %v239, %v256
        %vm258 = vcmp.ne.s32.totalorder %v240, %v256
        %vm259 = vcmp.ne.s32.totalorder %v241, %v256
        %vm260 = vcmp.ne.s32.totalorder %v242, %v256
        %vm261 = vcmp.ne.s32.totalorder %v243, %v256
        %vm262 = vcmp.ne.s32.totalorder %v244, %v256
        %vm263 = vcmp.ne.s32.totalorder %v245, %v256
        %vm264 = vcmp.ne.s32.totalorder %v246, %v256
        %vm265 = vcmp.ne.s32.totalorder %v247, %v256
        %vm266 = vcmp.ne.s32.totalorder %v248, %v256
        %vm267 = vcmp.ne.s32.totalorder %v249, %v256
        %vm268 = vcmp.ne.s32.totalorder %v250, %v256
        %vm269 = vcmp.ne.s32.totalorder %v251, %v256
        %vm270 = vcmp.ne.s32.totalorder %v252, %v256
        %vm271 = vcmp.ne.s32.totalorder %v253, %v256
        %vm272 = vcmp.ne.s32.totalorder %v254, %v256
        %vm273 = vcmp.lt.s32.totalorder %v239, 16
        %vm274 = vcmp.lt.s32.totalorder %v240, 16
        %vm275 = vcmp.lt.s32.totalorder %v241, 16
        %vm276 = vcmp.lt.s32.totalorder %v242, 16
        %vm277 = vcmp.lt.s32.totalorder %v243, 16
        %vm278 = vcmp.lt.s32.totalorder %v244, 16
        %vm279 = vcmp.lt.s32.totalorder %v245, 16
        %vm280 = vcmp.lt.s32.totalorder %v246, 16
        %vm281 = vcmp.lt.s32.totalorder %v247, 16
        %vm282 = vcmp.lt.s32.totalorder %v248, 16
        %vm283 = vcmp.lt.s32.totalorder %v249, 16
        %vm284 = vcmp.lt.s32.totalorder %v250, 16
        %vm285 = vcmp.lt.s32.totalorder %v251, 16
        %vm286 = vcmp.lt.s32.totalorder %v252, 16
        %vm287 = vcmp.lt.s32.totalorder %v253, 16
        %vm288 = vcmp.lt.s32.totalorder %v254, 16
        %vm289 = vmand %vm257, %vm273
        %vm290 = vmand %vm258, %vm274
        %vm291 = vmand %vm259, %vm275
        %vm292 = vmand %vm260, %vm276
        %vm293 = vmand %vm261, %vm277
        %vm294 = vmand %vm262, %vm278
        %vm295 = vmand %vm263, %vm279
        %vm296 = vmand %vm264, %vm280
        %vm297 = vmand %vm265, %vm281
        %vm298 = vmand %vm266, %vm282
        %vm299 = vmand %vm267, %vm283
        %vm300 = vmand %vm268, %vm284
        %vm301 = vmand %vm269, %vm285
        %vm302 = vmand %vm270, %vm286
        %vm303 = vmand %vm271, %vm287
        %vm304 = vmand %vm272, %vm288
        %vm305 = vcmp.lt.s32.totalorder %v256, 16
        %vm306 = vmand %vm289, %vm305
        %vm307 = vmand %vm290, %vm305
        %vm308 = vmand %vm291, %vm305
        %vm309 = vmand %vm292, %vm305
        %vm310 = vmand %vm293, %vm305
        %vm311 = vmand %vm294, %vm305
        %vm312 = vmand %vm295, %vm305
        %vm313 = vmand %vm296, %vm305
        %vm314 = vmand %vm297, %vm305
        %vm315 = vmand %vm298, %vm305
        %vm316 = vmand %vm299, %vm305
        %vm317 = vmand %vm300, %vm305
        %vm318 = vmand %vm301, %vm305
        %vm319 = vmand %vm302, %vm305
        %vm320 = vmand %vm303, %vm305
        %vm321 = vmand %vm304, %vm305
        %v322 = vxor.u32 %v222, 2147483648
        %v323 = vxor.u32 %v223, 2147483648
        %v324 = vxor.u32 %v224, 2147483648
        %v325 = vxor.u32 %v225, 2147483648
        %v326 = vxor.u32 %v226, 2147483648
        %v327 = vxor.u32 %v227, 2147483648
        %v328 = vxor.u32 %v228, 2147483648
        %v329 = vxor.u32 %v229, 2147483648
        %v330 = vxor.u32 %v230, 2147483648
        %v331 = vxor.u32 %v231, 2147483648
        %v332 = vxor.u32 %v232, 2147483648
        %v333 = vxor.u32 %v233, 2147483648
        %v334 = vxor.u32 %v234, 2147483648
        %v335 = vxor.u32 %v235, 2147483648
        %v336 = vxor.u32 %v236, 2147483648
        %v337 = vxor.u32 %v237, 2147483648
        %v338 = vmul.f32 %v322, 1.442695
        %v339 = vpow.pop %v338
        %v340 = vmul.f32 %v323, 1.442695
        %v341 = vpow.pop %v340
        %v342 = vmul.f32 %v324, 1.442695
        %v343 = vpow.pop %v342
        %v344 = vmul.f32 %v325, 1.442695
        %v345 = vpow.pop %v344
        %v346 = vmul.f32 %v326, 1.442695
        %v347 = vpow.pop %v346
        %v348 = vmul.f32 %v327, 1.442695
        %v349 = vpow.pop %v348
        %v350 = vmul.f32 %v328, 1.442695
        %v351 = vpow.pop %v350
        %v352 = vmul.f32 %v329, 1.442695
        %v353 = vpow.pop %v352
        %v354 = vmul.f32 %v330, 1.442695
        %v355 = vpow.pop %v354
        %v356 = vmul.f32 %v331, 1.442695
        %v357 = vpow.pop %v356
        %v358 = vmul.f32 %v332, 1.442695
        %v359 = vpow.pop %v358
        %v360 = vmul.f32 %v333, 1.442695
        %v361 = vpow.pop %v360
        %v362 = vmul.f32 %v334, 1.442695
        %v363 = vpow.pop %v362
        %v364 = vmul.f32 %v335, 1.442695
        %v365 = vpow.pop %v364
        %v366 = vmul.f32 %v336, 1.442695
        %v367 = vpow.pop %v366
        %v368 = vmul.f32 %v337, 1.442695
        %v369 = vpow.pop %v368
        %v370 = vadd.f32 %v339, 1.0
        %v371 = vadd.f32 %v341, 1.0
        %v372 = vadd.f32 %v343, 1.0
        %v373 = vadd.f32 %v345, 1.0
        %v374 = vadd.f32 %v347, 1.0
        %v375 = vadd.f32 %v349, 1.0
        %v376 = vadd.f32 %v351, 1.0
        %v377 = vadd.f32 %v353, 1.0
        %v378 = vadd.f32 %v355, 1.0
        %v379 = vadd.f32 %v357, 1.0
        %v380 = vadd.f32 %v359, 1.0
        %v381 = vadd.f32 %v361, 1.0
        %v382 = vadd.f32 %v363, 1.0
        %v383 = vadd.f32 %v365, 1.0
        %v384 = vadd.f32 %v367, 1.0
        %v385 = vadd.f32 %v369, 1.0
        %v386 = vrcp.pop %v370
        %v387 = vmul.f32 %v370, %v386
        %v388 = vsub.f32 1.0, %v387
        %v389 = vmul.f32 %v386, %v388
        %v390 = vadd.f32 %v386, %v389
        %vm391 = vweird.f32 %v370
        %vm392 = vweird.f32 %v386
        %vm393 = vmor %vm391, %vm392
        %v394 = vsel %vm393, %v386, %v390
        %v395 = vand.u32 2147483647, %v370
        %vm396 = vcmp.eq.f32.partialorder %v395, 8.507059e+37
        %v397 = vand.u32 %v370, 2147483648
        %v398 = vor.u32 1.1754944e-38, %v397
        %v399 = vsel %vm396, %v398, %v394
        %v400 = vmul.f32 1.0, %v399
        %v401 = vrcp.pop %v371
        %v402 = vmul.f32 %v371, %v401
        %v403 = vsub.f32 1.0, %v402
        %v404 = vmul.f32 %v401, %v403
        %v405 = vadd.f32 %v401, %v404
        %vm406 = vweird.f32 %v371
        %vm407 = vweird.f32 %v401
        %vm408 = vmor %vm406, %vm407
        %v409 = vsel %vm408, %v401, %v405
        %v410 = vand.u32 2147483647, %v371
        %vm411 = vcmp.eq.f32.partialorder %v410, 8.507059e+37
        %v412 = vand.u32 %v371, 2147483648
        %v413 = vor.u32 1.1754944e-38, %v412
        %v414 = vsel %vm411, %v413, %v409
        %v415 = vmul.f32 1.0, %v414
        %v416 = vrcp.pop %v372
        %v417 = vmul.f32 %v372, %v416
        %v418 = vsub.f32 1.0, %v417
        %v419 = vmul.f32 %v416, %v418
        %v420 = vadd.f32 %v416, %v419
        %vm421 = vweird.f32 %v372
        %vm422 = vweird.f32 %v416
        %vm423 = vmor %vm421, %vm422
        %v424 = vsel %vm423, %v416, %v420
        %v425 = vand.u32 2147483647, %v372
        %vm426 = vcmp.eq.f32.partialorder %v425, 8.507059e+37
        %v427 = vand.u32 %v372, 2147483648
        %v428 = vor.u32 1.1754944e-38, %v427
        %v429 = vsel %vm426, %v428, %v424
        %v430 = vmul.f32 1.0, %v429
        %v431 = vrcp.pop %v373
        %v432 = vmul.f32 %v373, %v431
        %v433 = vsub.f32 1.0, %v432
        %v434 = vmul.f32 %v431, %v433
        %v435 = vadd.f32 %v431, %v434
        %vm436 = vweird.f32 %v373
        %vm437 = vweird.f32 %v431
        %vm438 = vmor %vm436, %vm437
        %v439 = vsel %vm438, %v431, %v435
        %v440 = vand.u32 2147483647, %v373
        %vm441 = vcmp.eq.f32.partialorder %v440, 8.507059e+37
        %v442 = vand.u32 %v373, 2147483648
        %v443 = vor.u32 1.1754944e-38, %v442
        %v444 = vsel %vm441, %v443, %v439
        %v445 = vmul.f32 1.0, %v444
        %v446 = vrcp.pop %v374
        %v447 = vmul.f32 %v374, %v446
        %v448 = vsub.f32 1.0, %v447
        %v449 = vmul.f32 %v446, %v448
        %v450 = vadd.f32 %v446, %v449
        %vm451 = vweird.f32 %v374
        %vm452 = vweird.f32 %v446
        %vm453 = vmor %vm451, %vm452
        %v454 = vsel %vm453, %v446, %v450
        %v455 = vand.u32 2147483647, %v374
        %vm456 = vcmp.eq.f32.partialorder %v455, 8.507059e+37
        %v457 = vand.u32 %v374, 2147483648
        %v458 = vor.u32 1.1754944e-38, %v457
        %v459 = vsel %vm456, %v458, %v454
        %v460 = vmul.f32 1.0, %v459
        %v461 = vrcp.pop %v375
        %v462 = vmul.f32 %v375, %v461
        %v463 = vsub.f32 1.0, %v462
        %v464 = vmul.f32 %v461, %v463
        %v465 = vadd.f32 %v461, %v464
        %vm466 = vweird.f32 %v375
        %vm467 = vweird.f32 %v461
        %vm468 = vmor %vm466, %vm467
        %v469 = vsel %vm468, %v461, %v465
        %v470 = vand.u32 2147483647, %v375
        %vm471 = vcmp.eq.f32.partialorder %v470, 8.507059e+37
        %v472 = vand.u32 %v375, 2147483648
        %v473 = vor.u32 1.1754944e-38, %v472
        %v474 = vsel %vm471, %v473, %v469
        %v475 = vmul.f32 1.0, %v474
        %v476 = vrcp.pop %v376
        %v477 = vmul.f32 %v376, %v476
        %v478 = vsub.f32 1.0, %v477
        %v479 = vmul.f32 %v476, %v478
        %v480 = vadd.f32 %v476, %v479
        %vm481 = vweird.f32 %v376
        %vm482 = vweird.f32 %v476
        %vm483 = vmor %vm481, %vm482
        %v484 = vsel %vm483, %v476, %v480
        %v485 = vand.u32 2147483647, %v376
        %vm486 = vcmp.eq.f32.partialorder %v485, 8.507059e+37
        %v487 = vand.u32 %v376, 2147483648
        %v488 = vor.u32 1.1754944e-38, %v487
        %v489 = vsel %vm486, %v488, %v484
        %v490 = vmul.f32 1.0, %v489
        %v491 = vrcp.pop %v377
        %v492 = vmul.f32 %v377, %v491
        %v493 = vsub.f32 1.0, %v492
        %v494 = vmul.f32 %v491, %v493
        %v495 = vadd.f32 %v491, %v494
        %vm496 = vweird.f32 %v377
        %vm497 = vweird.f32 %v491
        %vm498 = vmor %vm496, %vm497
        %v499 = vsel %vm498, %v491, %v495
        %v500 = vand.u32 2147483647, %v377
        %vm501 = vcmp.eq.f32.partialorder %v500, 8.507059e+37
        %v502 = vand.u32 %v377, 2147483648
        %v503 = vor.u32 1.1754944e-38, %v502
        %v504 = vsel %vm501, %v503, %v499
        %v505 = vmul.f32 1.0, %v504
        %v506 = vrcp.pop %v378
        %v507 = vmul.f32 %v378, %v506
        %v508 = vsub.f32 1.0, %v507
        %v509 = vmul.f32 %v506, %v508
        %v510 = vadd.f32 %v506, %v509
        %vm511 = vweird.f32 %v378
        %vm512 = vweird.f32 %v506
        %vm513 = vmor %vm511, %vm512
        %v514 = vsel %vm513, %v506, %v510
        %v515 = vand.u32 2147483647, %v378
        %vm516 = vcmp.eq.f32.partialorder %v515, 8.507059e+37
        %v517 = vand.u32 %v378, 2147483648
        %v518 = vor.u32 1.1754944e-38, %v517
        %v519 = vsel %vm516, %v518, %v514
        %v520 = vmul.f32 1.0, %v519
        %v521 = vrcp.pop %v379
        %v522 = vmul.f32 %v379, %v521
        %v523 = vsub.f32 1.0, %v522
        %v524 = vmul.f32 %v521, %v523
        %v525 = vadd.f32 %v521, %v524
        %vm526 = vweird.f32 %v379
        %vm527 = vweird.f32 %v521
        %vm528 = vmor %vm526, %vm527
        %v529 = vsel %vm528, %v521, %v525
        %v530 = vand.u32 2147483647, %v379
        %vm531 = vcmp.eq.f32.partialorder %v530, 8.507059e+37
        %v532 = vand.u32 %v379, 2147483648
        %v533 = vor.u32 1.1754944e-38, %v532
        %v534 = vsel %vm531, %v533, %v529
        %v535 = vmul.f32 1.0, %v534
        %v536 = vrcp.pop %v380
        %v537 = vmul.f32 %v380, %v536
        %v538 = vsub.f32 1.0, %v537
        %v539 = vmul.f32 %v536, %v538
        %v540 = vadd.f32 %v536, %v539
        %vm541 = vweird.f32 %v380
        %vm542 = vweird.f32 %v536
        %vm543 = vmor %vm541, %vm542
        %v544 = vsel %vm543, %v536, %v540
        %v545 = vand.u32 2147483647, %v380
        %vm546 = vcmp.eq.f32.partialorder %v545, 8.507059e+37
        %v547 = vand.u32 %v380, 2147483648
        %v548 = vor.u32 1.1754944e-38, %v547
        %v549 = vsel %vm546, %v548, %v544
        %v550 = vmul.f32 1.0, %v549
        %v551 = vrcp.pop %v381
        %v552 = vmul.f32 %v381, %v551
        %v553 = vsub.f32 1.0, %v552
        %v554 = vmul.f32 %v551, %v553
        %v555 = vadd.f32 %v551, %v554
        %vm556 = vweird.f32 %v381
        %vm557 = vweird.f32 %v551
        %vm558 = vmor %vm556, %vm557
        %v559 = vsel %vm558, %v551, %v555
        %v560 = vand.u32 2147483647, %v381
        %vm561 = vcmp.eq.f32.partialorder %v560, 8.507059e+37
        %v562 = vand.u32 %v381, 2147483648
        %v563 = vor.u32 1.1754944e-38, %v562
        %v564 = vsel %vm561, %v563, %v559
        %v565 = vmul.f32 1.0, %v564
        %v566 = vrcp.pop %v382
        %v567 = vmul.f32 %v382, %v566
        %v568 = vsub.f32 1.0, %v567
        %v569 = vmul.f32 %v566, %v568
        %v570 = vadd.f32 %v566, %v569
        %vm571 = vweird.f32 %v382
        %vm572 = vweird.f32 %v566
        %vm573 = vmor %vm571, %vm572
        %v574 = vsel %vm573, %v566, %v570
        %v575 = vand.u32 2147483647, %v382
        %vm576 = vcmp.eq.f32.partialorder %v575, 8.507059e+37
        %v577 = vand.u32 %v382, 2147483648
        %v578 = vor.u32 1.1754944e-38, %v577
        %v579 = vsel %vm576, %v578, %v574
        %v580 = vmul.f32 1.0, %v579
        %v581 = vrcp.pop %v383
        %v582 = vmul.f32 %v383, %v581
        %v583 = vsub.f32 1.0, %v582
        %v584 = vmul.f32 %v581, %v583
        %v585 = vadd.f32 %v581, %v584
        %vm586 = vweird.f32 %v383
        %vm587 = vweird.f32 %v581
        %vm588 = vmor %vm586, %vm587
        %v589 = vsel %vm588, %v581, %v585
        %v590 = vand.u32 2147483647, %v383
        %vm591 = vcmp.eq.f32.partialorder %v590, 8.507059e+37
        %v592 = vand.u32 %v383, 2147483648
        %v593 = vor.u32 1.1754944e-38, %v592
        %v594 = vsel %vm591, %v593, %v589
        %v595 = vmul.f32 1.0, %v594
        %v596 = vrcp.pop %v384
        %v597 = vmul.f32 %v384, %v596
        %v598 = vsub.f32 1.0, %v597
        %v599 = vmul.f32 %v596, %v598
        %v600 = vadd.f32 %v596, %v599
        %vm601 = vweird.f32 %v384
        %vm602 = vweird.f32 %v596
        %vm603 = vmor %vm601, %vm602
        %v604 = vsel %vm603, %v596, %v600
        %v605 = vand.u32 2147483647, %v384
        %vm606 = vcmp.eq.f32.partialorder %v605, 8.507059e+37
        %v607 = vand.u32 %v384, 2147483648
        %v608 = vor.u32 1.1754944e-38, %v607
        %v609 = vsel %vm606, %v608, %v604
        %v610 = vmul.f32 1.0, %v609
        %v611 = vrcp.pop %v385
        %v612 = vmul.f32 %v385, %v611
        %v613 = vsub.f32 1.0, %v612
        %v614 = vmul.f32 %v611, %v613
        %v615 = vadd.f32 %v611, %v614
        %vm616 = vweird.f32 %v385
        %vm617 = vweird.f32 %v611
        %vm618 = vmor %vm616, %vm617
        %v619 = vsel %vm618, %v611, %v615
        %v620 = vand.u32 2147483647, %v385
        %vm621 = vcmp.eq.f32.partialorder %v620, 8.507059e+37
        %v622 = vand.u32 %v385, 2147483648
        %v623 = vor.u32 1.1754944e-38, %v622
        %v624 = vsel %vm621, %v623, %v619
        %v625 = vmul.f32 1.0, %v624
        %v626 = vsel %vm306, %v400, 0.0
        %v627 = vsel %vm307, %v415, 0.0
        %v628 = vsel %vm308, %v430, 0.0
        %v629 = vsel %vm309, %v445, 0.0
        %v630 = vsel %vm310, %v460, 0.0
        %v631 = vsel %vm311, %v475, 0.0
        %v632 = vsel %vm312, %v490, 0.0
        %v633 = vsel %vm313, %v505, 0.0
        %v634 = vsel %vm314, %v520, 0.0
        %v635 = vsel %vm315, %v535, 0.0
        %v636 = vsel %vm316, %v550, 0.0
        %v637 = vsel %vm317, %v565, 0.0
        %v638 = vsel %vm318, %v580, 0.0
        %v639 = vsel %vm319, %v595, 0.0
        %v640 = vsel %vm320, %v610, 0.0
        %v641 = vsel %vm321, %v625, 0.0
        %642 = vst [vmem:[%s5] sm:$0xff] %v626
        %643 = vst [vmem:[%s5 + $0x8] sm:$0xff] %v627
        %644 = vst [vmem:[%s5 + $0x10] sm:$0xff] %v628
        %645 = vst [vmem:[%s5 + $0x18] sm:$0xff] %v629
        %646 = vst [vmem:[%s5 + $0x20] sm:$0xff] %v630
        %647 = vst [vmem:[%s5 + $0x28] sm:$0xff] %v631
        %648 = vst [vmem:[%s5 + $0x30] sm:$0xff] %v632
        %649 = vst [vmem:[%s5 + $0x38] sm:$0xff] %v633
        %650 = vst [vmem:[%s5 + $0x40] sm:$0xff] %v634
        %651 = vst [vmem:[%s5 + $0x48] sm:$0xff] %v635
        %652 = vst [vmem:[%s5 + $0x50] sm:$0xff] %v636
        %653 = vst [vmem:[%s5 + $0x58] sm:$0xff] %v637
        %654 = vst [vmem:[%s5 + $0x60] sm:$0xff] %v638
        %655 = vst [vmem:[%s5 + $0x68] sm:$0xff] %v639
        %656 = vst [vmem:[%s5 + $0x70] sm:$0xff] %v640
        %657 = vst [vmem:[%s5 + $0x78] sm:$0xff] %v641
        %v658 = vld [vmem:[%s2] sm:$0xff]
        %v659 = vld [vmem:[%s2 + $0x8] sm:$0xff]
        %v660 = vld [vmem:[%s2 + $0x10] sm:$0xff]
        %v661 = vld [vmem:[%s2 + $0x18] sm:$0xff]
        %v662 = vld [vmem:[%s2 + $0x20] sm:$0xff]
        %v663 = vld [vmem:[%s2 + $0x28] sm:$0xff]
        %v664 = vld [vmem:[%s2 + $0x30] sm:$0xff]
        %v665 = vld [vmem:[%s2 + $0x38] sm:$0xff]
        %v666 = vld [vmem:[%s2 + $0x40] sm:$0xff]
        %v667 = vld [vmem:[%s2 + $0x48] sm:$0xff]
        %v668 = vld [vmem:[%s2 + $0x50] sm:$0xff]
        %v669 = vld [vmem:[%s2 + $0x58] sm:$0xff]
        %v670 = vld [vmem:[%s2 + $0x60] sm:$0xff]
        %v671 = vld [vmem:[%s2 + $0x68] sm:$0xff]
        %v672 = vld [vmem:[%s2 + $0x70] sm:$0xff]
        %v673 = vld [vmem:[%s2 + $0x78] sm:$0xff]
        %v674 = vmul.f32 %v626, %v658
        %v675 = vmul.f32 %v627, %v659
        %v676 = vmul.f32 %v628, %v660
        %v677 = vmul.f32 %v629, %v661
        %v678 = vmul.f32 %v630, %v662
        %v679 = vmul.f32 %v631, %v663
        %v680 = vmul.f32 %v632, %v664
        %v681 = vmul.f32 %v633, %v665
        %v682 = vmul.f32 %v634, %v666
        %v683 = vmul.f32 %v635, %v667
        %v684 = vmul.f32 %v636, %v668
        %v685 = vmul.f32 %v637, %v669
        %v686 = vmul.f32 %v638, %v670
        %v687 = vmul.f32 %v639, %v671
        %v688 = vmul.f32 %v640, %v672
        %v689 = vmul.f32 %v641, %v673
        %690 = vst [vmem:[#allocation2] sm:$0xff] %v674
        %691 = vst [vmem:[#allocation2 + $0x8] sm:$0xff] %v675
        %692 = vst [vmem:[#allocation2 + $0x10] sm:$0xff] %v676
        %693 = vst [vmem:[#allocation2 + $0x18] sm:$0xff] %v677
        %694 = vst [vmem:[#allocation2 + $0x20] sm:$0xff] %v678
        %695 = vst [vmem:[#allocation2 + $0x28] sm:$0xff] %v679
        %696 = vst [vmem:[#allocation2 + $0x30] sm:$0xff] %v680
        %697 = vst [vmem:[#allocation2 + $0x38] sm:$0xff] %v681
        %698 = vst [vmem:[#allocation2 + $0x40] sm:$0xff] %v682
        %699 = vst [vmem:[#allocation2 + $0x48] sm:$0xff] %v683
        %700 = vst [vmem:[#allocation2 + $0x50] sm:$0xff] %v684
        %701 = vst [vmem:[#allocation2 + $0x58] sm:$0xff] %v685
        %702 = vst [vmem:[#allocation2 + $0x60] sm:$0xff] %v686
        %703 = vst [vmem:[#allocation2 + $0x68] sm:$0xff] %v687
        %704 = vst [vmem:[#allocation2 + $0x70] sm:$0xff] %v688
        %705 = vst [vmem:[#allocation2 + $0x78] sm:$0xff] %v689
      $region40: #{overall_net_forward.1} parent=35 // pred_fallthru
        _
      %v706 = vld [vmem:[%s213] sm:$0xff]
      %v707 = vld [vmem:[#allocation2] sm:$0xff]
      %v708 = vld [vmem:[#allocation2 + $0x8] sm:$0xff]
      %v709 = vld [vmem:[#allocation2 + $0x10] sm:$0xff]
      %v710 = vld [vmem:[#allocation2 + $0x18] sm:$0xff]
      %v711 = vld [vmem:[#allocation2 + $0x20] sm:$0xff]
      %v712 = vld [vmem:[#allocation2 + $0x28] sm:$0xff]
      %v713 = vld [vmem:[#allocation2 + $0x30] sm:$0xff]
      %v714 = vld [vmem:[#allocation2 + $0x38] sm:$0xff]
      %v715 = vld [vmem:[#allocation2 + $0x40] sm:$0xff]
      %v716 = vld [vmem:[#allocation2 + $0x48] sm:$0xff]
      %v717 = vld [vmem:[#allocation2 + $0x50] sm:$0xff]
      %v718 = vld [vmem:[#allocation2 + $0x58] sm:$0xff]
      %v719 = vld [vmem:[#allocation2 + $0x60] sm:$0xff]
      %v720 = vld [vmem:[#allocation2 + $0x68] sm:$0xff]
      %v721 = vld [vmem:[#allocation2 + $0x70] sm:$0xff]
      %v722 = vld [vmem:[#allocation2 + $0x78] sm:$0xff]
      %v723 = vld [vmem:[%s3] sm:$0x1]
      %v725 = vperm.slane %v723, 0
      %727 = vmatpush.msra.mxu0 %v722
      %728 = vmatpush.msra.mxu0 %v721
      %729 = vmatpush.msra.mxu0 %v720
      %730 = vmatpush.msra.mxu0 %v719
      %731 = vmatpush.msra.mxu0 %v718
      %732 = vmatpush.msra.mxu0 %v717
      %733 = vmatpush.msra.mxu0 %v716
      %734 = vmatpush.msra.mxu0 %v715
      %735 = vmatpush.msra.mxu0 %v714
      %736 = vmatpush.msra.mxu0 %v713
      %737 = vmatpush.msra.mxu0 %v712
      %738 = vmatpush.msra.mxu0 %v711
      %739 = vmatpush.msra.mxu0 %v710
      %740 = vmatpush.msra.mxu0 %v709
      %741 = vmatpush.msra.mxu0 %v708
      %742 = vmatpush.msra.mxu0 %v707
      %743 = vmatmul.f32.gmra.mxu0 %v706
      %v744 = vpop.f32.mrf.mxu0
      %v745 = vadd.f32 %v725, %v744
      %746 = vdwg.mxu0
      %747 = vst [vmem:[%s217] sm:$0xff] %v745
      %p748 = scmp.lt.s32.totalorder %s17, 3
      %s749 = scalar_select %p748, %s17, 3
      %s750 = smul.addr %s749, 8
      %s751 = scalar_lea.vmem %s4, %s750
      // Predicated region
      $region41: #{overall_net_forward.1} parent=35 // pred_check
        %p752 = pneg %p124
      $region42: #{overall_net_forward.1} parent=35 // pred_check_branch
        %754 = sbr.rel (%p752) target = $region44
      $region43: #{overall_net_forward.1} parent=35 // pred_region
        _
      $region44: #{overall_net_forward.1} parent=35 // pred_fallthru
        _
      // Predicated region
      $region45: #{overall_net_forward.1} parent=35 // pred_check
        %p755 = pneg %p145
      $region46: #{overall_net_forward.1} parent=35 // pred_check_branch
        %757 = sbr.rel (%p755) target = $region48
      $region47: #{overall_net_forward.1} parent=35 // pred_region
        _
      $region48: #{overall_net_forward.1} parent=35 // pred_fallthru
        _
      // Predicated region
      $region49: #{overall_net_forward.1} parent=35 // pred_check
        %p758 = pneg %p145
      $region50: #{overall_net_forward.1} parent=35 // pred_check_branch
        %760 = sbr.rel (%p758) target = $region52
      $region51: #{overall_net_forward.1} parent=35 // pred_region
        _
      $region52: #{overall_net_forward.1} parent=35 // pred_fallthru
        _
    $region36: #{overall_net_forward.1} parent=5 // pred_fallthru
      _
    %p761 = scmp.le.s32.totalorder 2, %s12
    // Predicated region
    $region53: #{overall_net_forward.1} parent=5 // pred_check
      %p762 = pneg %p761
    $region54: #{overall_net_forward.1} parent=5 // pred_check_branch
      %764 = sbr.rel (%p762) target = $region56
    $region55: #{overall_net_forward.1} parent=5 // pred_region
      %s765 = ssub.s32 %s12, 2
      // Predicated region
      $region57: #{overall_net_forward.1} parent=55 // pred_check
        %p766 = pneg %p130
      $region58: #{overall_net_forward.1} parent=55 // pred_check_branch
        %768 = sbr.rel (%p766) target = $region60
      $region59: #{overall_net_forward.1} parent=55 // pred_region
        %p769 = scmp.lt.s32.totalorder %s18, 3
        %s770 = scalar_select %p769, %s18, 3
        %s771 = smul.addr %s770, 8
        %s772 = scalar_lea.vmem %s4, %s771
      $region60: #{overall_net_forward.1} parent=55 // pred_fallthru
        _
    $region56: #{overall_net_forward.1} parent=5 // pred_fallthru
      _
  $region6: #{overall_net_forward.1} parent=0 // loop_footer
    %s16 = sadd.s32 1, %s12
  $region7: #{overall_net_forward.1} parent=0 // loop_footer_branch
    %11 = sbr.rel target = $region3
  $region8: #{overall_net_forward.1} parent=0 // loop_exit
    _

</llo_original>
